<compile_context>
chip_gen: v6e
topology: v6e:2x2x1
jax: 0.10.0
libtpu: 0.0.40
codegen_flags: <defaults>
</compile_context>

<pallas_src>
import jax
import jax.numpy as jnp
from jax.experimental import pallas as pl
from jax.experimental.pallas import tpu as pltpu


def mlp_kernel(x_ref, w1_ref, b1_ref, w2_ref, b2_ref, o_ref):
    # x_ref:  [TM, in_dim]       (VMEM, pipelined over the batch grid axis)
    # w1_ref: [in_dim, hidden]   (VMEM, resident across grid steps)
    # b1_ref: [1, hidden]        (VMEM, resident)
    # w2_ref: [hidden, n_out_p]  (VMEM, resident, n_out_p lane-dense)
    # b2_ref: [1, n_out_p]       (VMEM, resident)
    # o_ref:  [TM, n_out_p]      (VMEM, lane-dense full-width stores)
    x = x_ref[...]

    # First linear layer (MXU matmul, f32 accumulation) + bias.
    h = jnp.dot(x, w1_ref[...], preferred_element_type=jnp.float32) + b1_ref[...]

    # Exact GELU (matches torch.nn.GELU() default, erf-based).
    inv_sqrt2 = jnp.float32(0.7071067811865476)
    g = 0.5 * h * (1.0 + jax.lax.erf(h * inv_sqrt2))

    # Dropout(p=0.2): identity at inference (eval) time.

    # Second linear layer + bias, lane-dense store.
    out = jnp.dot(g, w2_ref[...], preferred_element_type=jnp.float32) + b2_ref[...]
    o_ref[...] = out.astype(o_ref.dtype)


def classifier_forward(x, w1, b1, w2, b2, *, tm=None):
    """Fused MLP forward. x: [B, in_dim] f32. Returns [B, n_out] f32."""
    B, in_dim = x.shape
    hidden = w1.shape[1]
    n_out = w2.shape[1]

    LANE = 128
    SUBLANE = 8

    # ---- Lane-dense output: pad n_out up to a multiple of 128. ----
    n_out_p = max(LANE, pl.cdiv(n_out, LANE) * LANE)
    if n_out_p != n_out:
        w2_p = jnp.zeros((hidden, n_out_p), w2.dtype).at[:, :n_out].set(w2)
        b2_p = jnp.zeros((n_out_p,), b2.dtype).at[:n_out].set(b2)
    else:
        w2_p, b2_p = w2, b2

    # ---- Batch tiling: tiles of up to 128 rows, padded to a multiple of 8. ----
    if tm is None:
        tm = 128 if B >= 128 else max(SUBLANE, pl.cdiv(B, SUBLANE) * SUBLANE)
    b_pad = pl.cdiv(B, tm) * tm
    if b_pad != B:
        x_p = jnp.zeros((b_pad, in_dim), x.dtype).at[:B, :].set(x)
    else:
        x_p = x

    grid = (b_pad // tm,)

    # Advisory cost estimate so XLA can overlap this call with neighbors.
    cost = pl.CostEstimate(
        flops=2 * b_pad * (in_dim * hidden + hidden * n_out_p),
        transcendentals=b_pad * hidden,
        bytes_accessed=4 * (x_p.size + w1.size + hidden
                            + w2_p.size + n_out_p + b_pad * n_out_p),
    )

    out_padded = pl.pallas_call(
        mlp_kernel,
        out_shape=jax.ShapeDtypeStruct((b_pad, n_out_p), jnp.float32),
        grid=grid,
        in_specs=[
            pl.BlockSpec((tm, in_dim), lambda i: (i, 0)),       # x: tiled over batch
            pl.BlockSpec((in_dim, hidden), lambda i: (0, 0)),   # w1: resident
            pl.BlockSpec((1, hidden), lambda i: (0, 0)),        # b1: resident
            pl.BlockSpec((hidden, n_out_p), lambda i: (0, 0)),  # w2: resident
            pl.BlockSpec((1, n_out_p), lambda i: (0, 0)),       # b2: resident
        ],
        out_specs=pl.BlockSpec((tm, n_out_p), lambda i: (i, 0)),
        compiler_params=pltpu.CompilerParams(
            dimension_semantics=("parallel",),
            vmem_limit_bytes=32 * 1024 * 1024,
        ),
        cost_estimate=cost,
    )(x_p, w1, b1.reshape(1, hidden), w2_p, b2_p.reshape(1, n_out_p))

    # Strip batch and output-lane padding.
    return out_padded[:B, :n_out]


def reference_forward(x, w1, b1, w2, b2):
    h = x @ w1 + b1
    g = jax.nn.gelu(h, approximate=False)
    return g @ w2 + b2


if __name__ == "__main__":
    # Small shapes consistent with the module: batch=2, in_dim=32,
    # hidden=256 (module default), n_out=10 (stand-in for len(idx2label)).
    B, IN_DIM, HIDDEN, N_OUT = 2, 32, 256, 10

    key = jax.random.PRNGKey(0)
    kx, kw1, kb1, kw2, kb2 = jax.random.split(key, 5)

    x = jax.random.normal(kx, (B, IN_DIM), dtype=jnp.float32)
    # Deterministic parameter init (uniform, roughly torch.nn.Linear scale).
    w1 = jax.random.uniform(kw1, (IN_DIM, HIDDEN), jnp.float32,
                            -1.0 / jnp.sqrt(IN_DIM), 1.0 / jnp.sqrt(IN_DIM))
    b1 = jax.random.uniform(kb1, (HIDDEN,), jnp.float32,
                            -1.0 / jnp.sqrt(IN_DIM), 1.0 / jnp.sqrt(IN_DIM))
    w2 = jax.random.uniform(kw2, (HIDDEN, N_OUT), jnp.float32,
                            -1.0 / jnp.sqrt(HIDDEN), 1.0 / jnp.sqrt(HIDDEN))
    b2 = jax.random.uniform(kb2, (N_OUT,), jnp.float32,
                            -1.0 / jnp.sqrt(HIDDEN), 1.0 / jnp.sqrt(HIDDEN))

    out = classifier_forward(x, w1, b1, w2, b2)
    out = jax.block_until_ready(out)
    ref = reference_forward(x, w1, b1, w2, b2)
    assert out.shape == (B, N_OUT)
    assert jnp.allclose(out, ref, atol=1e-4, rtol=1e-4), "mismatch vs reference (B=2)"

    # Also exercise the multi-step batch-tiled path (grid > 1, padded batch).
    B2 = 300
    x2 = jax.random.normal(jax.random.PRNGKey(1), (B2, IN_DIM), dtype=jnp.float32)
    out2 = jax.block_until_ready(classifier_forward(x2, w1, b1, w2, b2))
    ref2 = reference_forward(x2, w1, b1, w2, b2)
    assert out2.shape == (B2, N_OUT)
    assert jnp.allclose(out2, ref2, atol=1e-4, rtol=1e-4), "mismatch vs reference (B=300)"

    print("KERNEL_OK")
</pallas_src>

<mosaic_0001>
module attributes {stable_mosaic.version = 11 : i64} {
  func.func @mlp_kernel(%arg0: i32, %arg1: memref<8x32xf32, #tpu.memory_space<vmem>>, %arg2: memref<32x256xf32, #tpu.memory_space<vmem>>, %arg3: memref<1x256xf32, #tpu.memory_space<vmem>>, %arg4: memref<256x128xf32, #tpu.memory_space<vmem>>, %arg5: memref<1x128xf32, #tpu.memory_space<vmem>>, %arg6: memref<8x128xf32, #tpu.memory_space<vmem>>) attributes {dimension_semantics = [#tpu.dimension_semantics<parallel>], iteration_bounds = array<i64: 1>, scalar_prefetch = 0 : i64, scratch_operands = 0 : i64, tpu.core_type = #tpu.core_type<tc>, window_params = [{transform_indices = @transform_0, window_bounds = array<i64: 8, 32>}, {pipeline_mode = #tpu.pipeline_mode<synchronous>, transform_indices = @transform_1, window_bounds = array<i64: 32, 256>}, {pipeline_mode = #tpu.pipeline_mode<synchronous>, transform_indices = @transform_2, window_bounds = array<i64: 1, 256>}, {pipeline_mode = #tpu.pipeline_mode<synchronous>, transform_indices = @transform_3, window_bounds = array<i64: 256, 128>}, {pipeline_mode = #tpu.pipeline_mode<synchronous>, transform_indices = @transform_4, window_bounds = array<i64: 1, 128>}, {transform_indices = @transform_5, window_bounds = array<i64: 8, 128>}]} {
    %c0 = arith.constant 0 : index
    %c0_0 = arith.constant 0 : index
    %0 = vector.load %arg1[%c0, %c0_0] : memref<8x32xf32, #tpu.memory_space<vmem>>, vector<8x32xf32>
    %c0_1 = arith.constant 0 : index
    %c0_2 = arith.constant 0 : index
    %1 = vector.load %arg2[%c0_1, %c0_2] : memref<32x256xf32, #tpu.memory_space<vmem>>, vector<32x256xf32>
    %cst = arith.constant dense<0.000000e+00> : vector<8x256xf32>
    %2 = tpu.matmul %0, %1, %cst {dimension_numbers = #tpu.dot_dimension_numbers<[1], [0], [0], [1], [0, 0, 1, 1], [], []>} : vector<8x32xf32>, vector<32x256xf32>, vector<8x256xf32> -> vector<8x256xf32>
    %c0_3 = arith.constant 0 : index
    %c0_4 = arith.constant 0 : index
    %3 = vector.load %arg3[%c0_3, %c0_4] : memref<1x256xf32, #tpu.memory_space<vmem>>, vector<1x256xf32>
    %4 = vector.broadcast %3 : vector<1x256xf32> to vector<8x256xf32>
    %5 = arith.addf %2, %4 : vector<8x256xf32>
    %cst_5 = arith.constant 5.000000e-01 : f32
    %6 = vector.broadcast %cst_5 : f32 to vector<8x256xf32>
    %7 = arith.mulf %6, %5 : vector<8x256xf32>
    %cst_6 = arith.constant 0.707106769 : f32
    %8 = vector.broadcast %cst_6 : f32 to vector<8x256xf32>
    %9 = arith.mulf %5, %8 : vector<8x256xf32>
    %10 = math.erf %9 : vector<8x256xf32>
    %cst_7 = arith.constant 1.000000e+00 : f32
    %11 = vector.broadcast %cst_7 : f32 to vector<8x256xf32>
    %12 = arith.addf %11, %10 : vector<8x256xf32>
    %13 = arith.mulf %7, %12 : vector<8x256xf32>
    %c0_8 = arith.constant 0 : index
    %c0_9 = arith.constant 0 : index
    %14 = vector.load %arg4[%c0_8, %c0_9] : memref<256x128xf32, #tpu.memory_space<vmem>>, vector<256x128xf32>
    %cst_10 = arith.constant dense<0.000000e+00> : vector<8x128xf32>
    %15 = tpu.matmul %13, %14, %cst_10 {dimension_numbers = #tpu.dot_dimension_numbers<[1], [0], [0], [1], [0, 0, 1, 1], [], []>} : vector<8x256xf32>, vector<256x128xf32>, vector<8x128xf32> -> vector<8x128xf32>
    %c0_11 = arith.constant 0 : index
    %c0_12 = arith.constant 0 : index
    %16 = vector.load %arg5[%c0_11, %c0_12] : memref<1x128xf32, #tpu.memory_space<vmem>>, vector<1x128xf32>
    %17 = vector.broadcast %16 : vector<1x128xf32> to vector<8x128xf32>
    %18 = arith.addf %15, %17 : vector<8x128xf32>
    %c0_13 = arith.constant 0 : index
    %c0_14 = arith.constant 0 : index
    %19 = vector.load %arg6[%c0_13, %c0_14] : memref<8x128xf32, #tpu.memory_space<vmem>>, vector<8x128xf32>
    tpu.vector_store %arg6[%c0_13, %c0_14], %18 {strides = array<i32>} : memref<8x128xf32, #tpu.memory_space<vmem>>, vector<8x128xf32>,
    return
  }
  func.func @transform_0(%arg0: i32) -> (i32, i32) {
    %c0_i32 = arith.constant 0 : i32
    %c0_i32_0 = arith.constant 0 : i32
    return %arg0, %c0_i32 : i32, i32
  }
  func.func @transform_1(%arg0: i32) -> (i32, i32) {
    %c0_i32 = arith.constant 0 : i32
    %c0_i32_0 = arith.constant 0 : i32
    %c0_i32_1 = arith.constant 0 : i32
    return %c0_i32, %c0_i32_0 : i32, i32
  }
  func.func @transform_2(%arg0: i32) -> (i32, i32) {
    %c0_i32 = arith.constant 0 : i32
    %c0_i32_0 = arith.constant 0 : i32
    %c0_i32_1 = arith.constant 0 : i32
    return %c0_i32, %c0_i32_0 : i32, i32
  }
  func.func @transform_3(%arg0: i32) -> (i32, i32) {
    %c0_i32 = arith.constant 0 : i32
    %c0_i32_0 = arith.constant 0 : i32
    %c0_i32_1 = arith.constant 0 : i32
    return %c0_i32, %c0_i32_0 : i32, i32
  }
  func.func @transform_4(%arg0: i32) -> (i32, i32) {
    %c0_i32 = arith.constant 0 : i32
    %c0_i32_0 = arith.constant 0 : i32
    %c0_i32_1 = arith.constant 0 : i32
    return %c0_i32, %c0_i32_0 : i32, i32
  }
  func.func @transform_5(%arg0: i32) -> (i32, i32) {
    %c0_i32 = arith.constant 0 : i32
    %c0_i32_0 = arith.constant 0 : i32
    return %arg0, %c0_i32 : i32, i32
  }
}

</mosaic_0001>

<llo_original>
// kernel: tpu_custom_call.1
$region0: #{tpu_custom_call.1}
  #allocation0 [shape = 'u32[]', space=smem, size = 0x4, offset = 0x4, fixed_abs, tag = 'smem constant byte address 0x4 - core index']
  #allocation1 [shape = 'u32[144,128]{1,0:T(1,128)}', space=vmem, size = 0x12000, scoped, tag = 'internal scratch']
  %s0 = inlined_call_operand.hbm [shape: f32[8,32], index: 0, kind: input, shape index: {}]
  %s1 = inlined_call_operand.hbm [shape: f32[32,256], index: 1, kind: input, shape index: {}]
  %s2 = inlined_call_operand.vmem [shape: f32[1,256], index: 2, kind: input, shape index: {}]
  %s3 = inlined_call_operand.hbm [shape: f32[256,128], index: 3, kind: input, shape index: {}]
  %s4 = inlined_call_operand.vmem [shape: f32[1,128], index: 4, kind: input, shape index: {}]
  %s5 = inlined_call_operand.hbm [shape: f32[8,128], index: 5, kind: output, shape index: {}]
  %s6 = sld [smem:[#allocation0]]
  $region42: #{tpu_custom_call.1} parent=0
    _
  %s8 = ssub.s32 1, %s6
  %s9 = scalar_select 0, %s8, %s6
  $region1: #{tpu_custom_call.1} parent=0
    #allocation2 [shape = 'u8[4096]{0}', space=vmem, size = 0x1000, scoped, tag = 'input window, operand 0, single buffered']
    #allocation3 [shape = 's32[1]{0}', space=sflag, size = 0x4, scoped, tag = 'scoped memory for tpu_custom_call.1']
    #allocation4 [shape = 's32[1]{0}', space=sflag, size = 0x4, scoped, tag = 'scoped memory for tpu_custom_call.1']
    #allocation5 [shape = 'u8[32768]{0}', space=vmem, size = 0x8000, scoped, tag = 'input window, operand 1, single buffered']
    #allocation6 [shape = 's32[1]{0}', space=sflag, size = 0x4, scoped, tag = 'scoped memory for tpu_custom_call.1']
    #allocation7 [shape = 'u8[131072]{0}', space=vmem, size = 0x20000, scoped, tag = 'input window, operand 3, single buffered']
    #allocation8 [shape = 'u8[4096]{0}', space=vmem, size = 0x1000, scoped, tag = 'output window, operand 0, single buffered']
    %10 = vsyncpa [#allocation3], 0
    %11 = vsyncpa [#allocation6], 0
    %12 = vsyncpa [#allocation4], 0
    // Predicated region
    $region2: #{tpu_custom_call.1} parent=1 // pred_check
      _
    $region3: #{tpu_custom_call.1} parent=1 // pred_check_branch
      %14 = sbr.rel (0) target = $region5
    $region4: #{tpu_custom_call.1} parent=1 // pred_region
      %s16 = ssub.s32 128, 128
      %17 = vsyncadd [#allocation3], %s16
      %s19 = sshll.u32 [#allocation2], 4
      %s20 = int_to_ptr.vmem [resolvable:$true] %s19
      %22 = dma.hbm_to_vmem [thread:$0]  %s0, 128, %s20, [#allocation3]
    $region5: #{tpu_custom_call.1} parent=1 // pred_fallthru
      _
    // Predicated region
    $region6: #{tpu_custom_call.1} parent=1 // pred_check
      _
    $region7: #{tpu_custom_call.1} parent=1 // pred_check_branch
      %24 = sbr.rel (0) target = $region9
    $region8: #{tpu_custom_call.1} parent=1 // pred_region
      %s26 = ssub.s32 1024, 1024
      %27 = vsyncadd [#allocation6], %s26
      %s28 = sshll.u32 [#allocation5], 4
      %s29 = int_to_ptr.vmem [resolvable:$true] %s28
      %34 = dma.hbm_to_vmem [thread:$0]  %s1, 1024, %s29, [#allocation6], 256, 256, 16
    $region9: #{tpu_custom_call.1} parent=1 // pred_fallthru
      _
    // Predicated region
    $region10: #{tpu_custom_call.1} parent=1 // pred_check
      _
    $region11: #{tpu_custom_call.1} parent=1 // pred_check_branch
      %36 = sbr.rel (0) target = $region13
    $region12: #{tpu_custom_call.1} parent=1 // pred_region
      _
    $region13: #{tpu_custom_call.1} parent=1 // pred_fallthru
      _
    // Predicated region
    $region14: #{tpu_custom_call.1} parent=1 // pred_check
      _
    $region15: #{tpu_custom_call.1} parent=1 // pred_check_branch
      %38 = sbr.rel (0) target = $region17
    $region16: #{tpu_custom_call.1} parent=1 // pred_region
      %s40 = ssub.s32 4096, 4096
      %41 = vsyncadd [#allocation6], %s40
      %s42 = sshll.u32 [#allocation7], 4
      %s43 = int_to_ptr.vmem [resolvable:$true] %s42
      %48 = dma.hbm_to_vmem [thread:$0]  %s3, 4096, %s43, [#allocation6], 128, 128, 8
    $region17: #{tpu_custom_call.1} parent=1 // pred_fallthru
      _
    // Predicated region
    $region18: #{tpu_custom_call.1} parent=1 // pred_check
      _
    $region19: #{tpu_custom_call.1} parent=1 // pred_check_branch
      %50 = sbr.rel (0) target = $region21
    $region20: #{tpu_custom_call.1} parent=1 // pred_region
      _
    $region21: #{tpu_custom_call.1} parent=1 // pred_fallthru
      _
    // Predicated region
    $region22: #{tpu_custom_call.1} parent=1 // pred_check
      _
    $region23: #{tpu_custom_call.1} parent=1 // pred_check_branch
      %52 = sbr.rel (0) target = $region25
    $region24: #{tpu_custom_call.1} parent=1 // pred_region
      %53 = dma.done [#allocation3], 128
    $region25: #{tpu_custom_call.1} parent=1 // pred_fallthru
      _
    // Predicated region
    $region26: #{tpu_custom_call.1} parent=1 // pred_check
      _
    $region27: #{tpu_custom_call.1} parent=1 // pred_check_branch
      %55 = sbr.rel (0) target = $region29
    $region28: #{tpu_custom_call.1} parent=1 // pred_region
      %56 = dma.done [#allocation6], 1024
    $region29: #{tpu_custom_call.1} parent=1 // pred_fallthru
      _
    // Predicated region
    $region30: #{tpu_custom_call.1} parent=1 // pred_check
      _
    $region31: #{tpu_custom_call.1} parent=1 // pred_check_branch
      %58 = sbr.rel (0) target = $region33
    $region32: #{tpu_custom_call.1} parent=1 // pred_region
      %59 = dma.done [#allocation6], 4096
    $region33: #{tpu_custom_call.1} parent=1 // pred_fallthru
      _
    %v60 = vld [vmem:[#allocation2] sm:$0xff]
    %v61 = vld [vmem:[#allocation5] sm:$0xff]
    %v62 = vld [vmem:[#allocation5 + $0x8] sm:$0xff]
    %v63 = vld [vmem:[#allocation5 + $0x10] sm:$0xff]
    %v64 = vld [vmem:[#allocation5 + $0x18] sm:$0xff]
    %v65 = vld [vmem:[#allocation5 + $0x20] sm:$0xff]
    %v66 = vld [vmem:[#allocation5 + $0x28] sm:$0xff]
    %v67 = vld [vmem:[#allocation5 + $0x30] sm:$0xff]
    %v68 = vld [vmem:[#allocation5 + $0x38] sm:$0xff]
    %v69 = vld [vmem:[%s2] sm:$0x3]
    %v71 = vlaneseq
    %v72 = vshrl.u32 %v71, 7
    %v73 = vsub.s32 0, %v72
    %v74 = vrot.slane %v69, %v73
    %v75 = vlaneseq
    %v76 = vshrl.u32 %v75, 7
    %v77 = vsub.s32 1, %v76
    %v78 = vrot.slane %v69, %v77
    %vm81 = vcmask 261120
    %v83 = vsel %vm81, %v60, 0
    %85 = vmatprep.subr.mxu0 0.0
    %86 = vmatpush1.msra.mxu0 0.0
    %87 = vmatprep.subr.mxu0 0.0
    %88 = vmatpush1.msra.mxu0 0.0
    %89 = vmatprep.subr.mxu0 0.0
    %90 = vmatpush1.msra.mxu0 0.0
    %91 = vmatprep.subr.mxu0 0.0
    %92 = vmatpush1.msra.mxu0 0.0
    %93 = vmatprep.subr.mxu0 0.0
    %94 = vmatpush1.msra.mxu0 0.0
    %95 = vmatprep.subr.mxu0 0.0
    %96 = vmatpush1.msra.mxu0 0.0
    %97 = vmatprep.subr.mxu0 0.0
    %98 = vmatpush1.msra.mxu0 0.0
    %99 = vmatprep.subr.mxu0 0.0
    %100 = vmatpush1.msra.mxu0 0.0
    %101 = vmatprep.subr.mxu0 0.0
    %102 = vmatpush1.msra.mxu0 0.0
    %103 = vmatprep.subr.mxu0 0.0
    %104 = vmatpush1.msra.mxu0 0.0
    %105 = vmatprep.subr.mxu0 0.0
    %106 = vmatpush1.msra.mxu0 0.0
    %107 = vmatprep.subr.mxu0 0.0
    %108 = vmatpush1.msra.mxu0 0.0
    %109 = vmatprep.subr.mxu0 %v68
    %110 = vmatpush1.msra.mxu0 %v67
    %111 = vmatprep.subr.mxu0 %v66
    %112 = vmatpush1.msra.mxu0 %v65
    %113 = vmatprep.subr.mxu0 %v64
    %114 = vmatpush1.msra.mxu0 %v63
    %115 = vmatprep.subr.mxu0 %v62
    %116 = vmatpush1.msra.mxu0 %v61
    %117 = vmatprep.subr.mxu0 0.0
    %118 = vmatpush2.msra.mxu0 0.0
    %119 = vmatprep.subr.mxu0 0.0
    %120 = vmatpush2.msra.mxu0 0.0
    %121 = vmatprep.subr.mxu0 0.0
    %122 = vmatpush2.msra.mxu0 0.0
    %123 = vmatprep.subr.mxu0 0.0
    %124 = vmatpush2.msra.mxu0 0.0
    %125 = vmatprep.subr.mxu0 0.0
    %126 = vmatpush2.msra.mxu0 0.0
    %127 = vmatprep.subr.mxu0 0.0
    %128 = vmatpush2.msra.mxu0 0.0
    %129 = vmatprep.subr.mxu0 0.0
    %130 = vmatpush2.msra.mxu0 0.0
    %131 = vmatprep.subr.mxu0 0.0
    %132 = vmatpush2.msra.mxu0 0.0
    %133 = vmatprep.subr.mxu0 0.0
    %134 = vmatpush2.msra.mxu0 0.0
    %135 = vmatprep.subr.mxu0 0.0
    %136 = vmatpush2.msra.mxu0 0.0
    %137 = vmatprep.subr.mxu0 0.0
    %138 = vmatpush2.msra.mxu0 0.0
    %139 = vmatprep.subr.mxu0 0.0
    %140 = vmatpush2.msra.mxu0 0.0
    %141 = vmatprep.subr.mxu0 0.0
    %142 = vmatpush2.msra.mxu0 0.0
    %143 = vmatprep.subr.mxu0 0.0
    %144 = vmatpush2.msra.mxu0 0.0
    %145 = vmatprep.subr.mxu0 0.0
    %146 = vmatpush2.msra.mxu0 0.0
    %147 = vmatprep.subr.mxu0 0.0
    %148 = vmatpush2.msra.mxu0 0.0
    %149 = vmatprep.mubr.f32.mxu0 0.0
    %150 = vmatmul.mubr.f32.gmra.mxu0 %v83
    %v151 = vpop.f32.mrf.mxu0
    %v152 = vadd.f32 %v74, %v151
    %v153 = vpop.f32.mrf.mxu0
    %v154 = vadd.f32 %v78, %v153
    %155 = vdwg.mxu0
    %v156 = vmul.f32 %v152, 0.5
    %v157 = vmul.f32 %v154, 0.5
    %v158 = vmul.f32 %v152, 0.70710677
    %v159 = vmul.f32 %v154, 0.70710677
    %v160 = verf.f32.pop %v158
    %v161 = verf.f32.pop %v159
    %v162 = vadd.f32 %v160, 1.0
    %v163 = vadd.f32 %v161, 1.0
    %v164 = vmul.f32 %v156, %v162
    %v165 = vmul.f32 %v157, %v163
    %v166 = vld [vmem:[#allocation7] sm:$0xff]
    %v167 = vld [vmem:[#allocation7 + $0x8] sm:$0xff]
    %v168 = vld [vmem:[#allocation7 + $0x10] sm:$0xff]
    %v169 = vld [vmem:[#allocation7 + $0x18] sm:$0xff]
    %v170 = vld [vmem:[#allocation7 + $0x20] sm:$0xff]
    %v171 = vld [vmem:[#allocation7 + $0x28] sm:$0xff]
    %v172 = vld [vmem:[#allocation7 + $0x30] sm:$0xff]
    %v173 = vld [vmem:[#allocation7 + $0x38] sm:$0xff]
    %v174 = vld [vmem:[#allocation7 + $0x40] sm:$0xff]
    %v175 = vld [vmem:[#allocation7 + $0x48] sm:$0xff]
    %v176 = vld [vmem:[#allocation7 + $0x50] sm:$0xff]
    %v177 = vld [vmem:[#allocation7 + $0x58] sm:$0xff]
    %v178 = vld [vmem:[#allocation7 + $0x60] sm:$0xff]
    %v179 = vld [vmem:[#allocation7 + $0x68] sm:$0xff]
    %v180 = vld [vmem:[#allocation7 + $0x70] sm:$0xff]
    %v181 = vld [vmem:[#allocation7 + $0x78] sm:$0xff]
    %v182 = vld [vmem:[#allocation7 + $0x80] sm:$0xff]
    %v183 = vld [vmem:[#allocation7 + $0x88] sm:$0xff]
    %v184 = vld [vmem:[#allocation7 + $0x90] sm:$0xff]
    %v185 = vld [vmem:[#allocation7 + $0x98] sm:$0xff]
    %v186 = vld [vmem:[#allocation7 + $0xa0] sm:$0xff]
    %v187 = vld [vmem:[#allocation7 + $0xa8] sm:$0xff]
    %v188 = vld [vmem:[#allocation7 + $0xb0] sm:$0xff]
    %v189 = vld [vmem:[#allocation7 + $0xb8] sm:$0xff]
    %v190 = vld [vmem:[#allocation7 + $0xc0] sm:$0xff]
    %v191 = vld [vmem:[#allocation7 + $0xc8] sm:$0xff]
    %v192 = vld [vmem:[#allocation7 + $0xd0] sm:$0xff]
    %v193 = vld [vmem:[#allocation7 + $0xd8] sm:$0xff]
    %v194 = vld [vmem:[#allocation7 + $0xe0] sm:$0xff]
    %v195 = vld [vmem:[#allocation7 + $0xe8] sm:$0xff]
    %v196 = vld [vmem:[#allocation7 + $0xf0] sm:$0xff]
    %v197 = vld [vmem:[#allocation7 + $0xf8] sm:$0xff]
    %v198 = vld [vmem:[%s4] sm:$0x1]
    %v200 = vlaneseq
    %v201 = vshrl.u32 %v200, 7
    %v202 = vsub.s32 0, %v201
    %v203 = vrot.slane %v198, %v202
    %205 = vmatprep.subr.mxu0 0.0
    %206 = vmatpush1.msra.mxu0 %v181
    %207 = vmatprep.subr.mxu0 0.0
    %208 = vmatpush1.msra.mxu0 %v180
    %209 = vmatprep.subr.mxu0 0.0
    %210 = vmatpush1.msra.mxu0 %v179
    %211 = vmatprep.subr.mxu0 0.0
    %212 = vmatpush1.msra.mxu0 %v178
    %213 = vmatprep.subr.mxu0 0.0
    %214 = vmatpush1.msra.mxu0 %v177
    %215 = vmatprep.subr.mxu0 0.0
    %216 = vmatpush1.msra.mxu0 %v176
    %217 = vmatprep.subr.mxu0 0.0
    %218 = vmatpush1.msra.mxu0 %v175
    %219 = vmatprep.subr.mxu0 0.0
    %220 = vmatpush1.msra.mxu0 %v174
    %221 = vmatprep.subr.mxu0 0.0
    %222 = vmatpush1.msra.mxu0 %v173
    %223 = vmatprep.subr.mxu0 0.0
    %224 = vmatpush1.msra.mxu0 %v172
    %225 = vmatprep.subr.mxu0 0.0
    %226 = vmatpush1.msra.mxu0 %v171
    %227 = vmatprep.subr.mxu0 0.0
    %228 = vmatpush1.msra.mxu0 %v170
    %229 = vmatprep.subr.mxu0 0.0
    %230 = vmatpush1.msra.mxu0 %v169
    %231 = vmatprep.subr.mxu0 0.0
    %232 = vmatpush1.msra.mxu0 %v168
    %233 = vmatprep.subr.mxu0 0.0
    %234 = vmatpush1.msra.mxu0 %v167
    %235 = vmatprep.subr.mxu0 0.0
    %236 = vmatpush1.msra.mxu0 %v166
    %237 = vmatprep.subr.mxu0 0.0
    %238 = vmatpush2.msra.mxu0 %v197
    %239 = vmatprep.subr.mxu0 0.0
    %240 = vmatpush2.msra.mxu0 %v196
    %241 = vmatprep.subr.mxu0 0.0
    %242 = vmatpush2.msra.mxu0 %v195
    %243 = vmatprep.subr.mxu0 0.0
    %244 = vmatpush2.msra.mxu0 %v194
    %245 = vmatprep.subr.mxu0 0.0
    %246 = vmatpush2.msra.mxu0 %v193
    %247 = vmatprep.subr.mxu0 0.0
    %248 = vmatpush2.msra.mxu0 %v192
    %249 = vmatprep.subr.mxu0 0.0
    %250 = vmatpush2.msra.mxu0 %v191
    %251 = vmatprep.subr.mxu0 0.0
    %252 = vmatpush2.msra.mxu0 %v190
    %253 = vmatprep.subr.mxu0 0.0
    %254 = vmatpush2.msra.mxu0 %v189
    %255 = vmatprep.subr.mxu0 0.0
    %256 = vmatpush2.msra.mxu0 %v188
    %257 = vmatprep.subr.mxu0 0.0
    %258 = vmatpush2.msra.mxu0 %v187
    %259 = vmatprep.subr.mxu0 0.0
    %260 = vmatpush2.msra.mxu0 %v186
    %261 = vmatprep.subr.mxu0 0.0
    %262 = vmatpush2.msra.mxu0 %v185
    %263 = vmatprep.subr.mxu0 0.0
    %264 = vmatpush2.msra.mxu0 %v184
    %265 = vmatprep.subr.mxu0 0.0
    %266 = vmatpush2.msra.mxu0 %v183
    %267 = vmatprep.subr.mxu0 0.0
    %268 = vmatpush2.msra.mxu0 %v182
    %269 = vmatprep.mubr.f32.mxu0 %v165
    %270 = vmatmul.mubr.f32.gmra.mxu0 %v164
    %v271 = vpop.f32.mrf.mxu0
    %v272 = vadd.f32 %v203, %v271
    %v273 = vpop.f32.mrf.mxu0
    %274 = vdwg.mxu0
    %275 = vst [vmem:[#allocation8] sm:$0xff] %v272
    // Predicated region
    $region34: #{tpu_custom_call.1} parent=1 // pred_check
      _
    $region35: #{tpu_custom_call.1} parent=1 // pred_check_branch
      %277 = sbr.rel (0) target = $region37
    $region36: #{tpu_custom_call.1} parent=1 // pred_region
      %s279 = ssub.s32 128, 128
      %280 = vsyncadd [#allocation4], %s279
      %s282 = sshll.u32 [#allocation8], 4
      %s283 = int_to_ptr.vmem [resolvable:$true] %s282
      %285 = dma.vmem_to_hbm [thread:$0]  %s283, 128, %s5, [#allocation4]
    $region37: #{tpu_custom_call.1} parent=1 // pred_fallthru
      _
    // Predicated region
    $region38: #{tpu_custom_call.1} parent=1 // pred_check
      _
    $region39: #{tpu_custom_call.1} parent=1 // pred_check_branch
      %287 = sbr.rel (0) target = $region41
    $region40: #{tpu_custom_call.1} parent=1 // pred_region
      %288 = dma.done [#allocation4], 128
    $region41: #{tpu_custom_call.1} parent=1 // pred_fallthru
      _
    %289 = vsyncpa [#allocation3], 1
    %290 = vsyncpa [#allocation6], 1
    %291 = vsyncpa [#allocation4], 1

</llo_original>
